<compile_context>
chip_gen: v5e
topology: v5e:2x2
jax: 0.10.0
libtpu: 0.0.40
codegen_flags: <defaults>
</compile_context>

<pallas_src>
import functools

import jax
import jax.numpy as jnp
from jax.experimental import pallas as pl
from jax.experimental.pallas import tpu as pltpu


_LANE = 128        # vreg lane width (last dim)
_BATCH_ALIGN = 16  # bf16 packs 16 rows per sublane group -> avoid relayout churn


def _round_up(x, m):
    return ((x + m - 1) // m) * m


# ---------------------------------------------------------------------------
# Activation functions (JAX equivalents of get_act_func)
# ---------------------------------------------------------------------------
def _get_act_func(key, approx_gelu=False):
    # approx_gelu=True uses the tanh approximation (single EUP op, effectively
    # free); default False matches torch.nn.functional.gelu (erf) exactly.
    funcs = {
        "tanh": jnp.tanh,
        "relu": lambda x: jnp.maximum(x, 0.0),
        "leaky_relu": lambda x: jnp.where(x >= 0, x, 0.01 * x),
        "mish": lambda x: x * jnp.tanh(jax.nn.softplus(x)),
        "gelu": lambda x: jax.nn.gelu(x, approximate=approx_gelu),
        "softplus": jax.nn.softplus,
    }
    if key is None:
        return None
    return funcs[key]


# transcendental ops per element, used only for the CostEstimate hint
_ACT_TRANSCENDENTALS = {
    None: 0, "relu": 0, "leaky_relu": 0,
    "tanh": 1, "gelu": 1, "softplus": 1, "mish": 2,
}


# ---------------------------------------------------------------------------
# Chip-generation probing (tile sizing / VMEM budget / carry dtype)
# ---------------------------------------------------------------------------
def _chip_info():
    vmem_cap = None
    try:
        vmem_cap = int(pltpu.get_tpu_info().vmem_capacity_bytes)
    except Exception:
        vmem_cap = None
    kind = ""
    try:
        kind = jax.devices()[0].device_kind.lower()
    except Exception:
        kind = ""
    if vmem_cap is None or vmem_cap <= 0:
        vmem_cap = 64 * 1024 * 1024   # conservative (v7x per-TensorCore)
    is_v7 = "v7" in kind
    is_v5e = ("v5e" in kind) or ("v5 lite" in kind) or ("v5litepod" in kind)
    return vmem_cap, is_v7, is_v5e


@functools.lru_cache(maxsize=1)
def _single_buffer_supported():
    """One-time capability probe for pipeline_mode=pl.Buffered(1)."""
    if not hasattr(pl, "Buffered"):
        return False

    def _copy(x_ref, o_ref):
        o_ref[...] = x_ref[...]

    try:
        f = pl.pallas_call(
            _copy,
            out_shape=jax.ShapeDtypeStruct((8, 128), jnp.float32),
            grid=(1,),
            in_specs=[pl.BlockSpec((8, 128), lambda i: (0, 0),
                                   pipeline_mode=pl.Buffered(1))],
            out_specs=pl.BlockSpec((8, 128), lambda i: (0, 0)),
        )
        jax.block_until_ready(f(jnp.zeros((8, 128), jnp.float32)))
        return True
    except Exception:
        return False


# ---------------------------------------------------------------------------
# One-time parameter preparation (hoisted out of the forward path)
# ---------------------------------------------------------------------------
def prepare_mlp_params(weights, biases, param_dtype=jnp.bfloat16):
    """Transpose/pad/cast MLP params once; reuse the result across forwards.

    weights[i]: PyTorch layout (out_i, in_i); biases[i]: (out_i,).
    Zero padding is exact (0.0 is exact in bf16): padded weight *rows* are
    zero, so junk in padded activation lanes (e.g. softplus(0)) never reaches
    a real output lane; padded output lanes/rows are sliced off at the end.
    """
    n_layers = len(weights)
    dims = [int(weights[0].shape[1])] + [int(w.shape[0]) for w in weights]
    dims_p = [_round_up(d, _LANE) for d in dims]

    flat_params = []
    for i in range(n_layers):
        w_t = jnp.asarray(weights[i], jnp.float32).T          # (in_i, out_i)
        w_p = jnp.zeros((dims_p[i], dims_p[i + 1]), jnp.float32)
        w_p = w_p.at[:dims[i], :dims[i + 1]].set(w_t).astype(param_dtype)
        b_p = jnp.zeros((1, dims_p[i + 1]), jnp.float32)
        b_p = b_p.at[0, :dims[i + 1]].set(jnp.asarray(biases[i], jnp.float32))
        flat_params.extend([w_p, b_p])

    return {
        "flat_params": tuple(jax.block_until_ready(p) for p in flat_params),
        "dims": tuple(dims),
        "dims_p": tuple(dims_p),
        "param_dtype": jnp.dtype(param_dtype),
        "n_layers": n_layers,
    }


# ---------------------------------------------------------------------------
# Pallas kernel: fused MLP forward (all layers resident in VMEM)
# ---------------------------------------------------------------------------
def _mlp_kernel(*refs, n_layers, act_hidden, act_last, carry_dtype):
    # refs = (x_ref, w0, b0, w1, b1, ..., wL, bL, o_ref)
    x_ref = refs[0]
    o_ref = refs[-1]
    params = refs[1:-1]

    h = x_ref[...]                      # already param_dtype -> no per-step cast
    for layer in range(n_layers):
        w_ref = params[2 * layer]       # (in_pad, out_pad), bf16 (or f32)
        b_ref = params[2 * layer + 1]   # (1, out_pad), f32
        z = jnp.dot(
            h.astype(w_ref.dtype), w_ref[...],
            preferred_element_type=jnp.float32,
        ) + b_ref[...]                  # bias add + activation in f32
        if layer < n_layers - 1:
            z = act_hidden(z)
            h = z.astype(carry_dtype)   # bf16 carry on v6e/v7x, f32 on v5e
        else:
            if act_last is not None:
                z = act_last(z)
            h = z
    o_ref[...] = h.astype(o_ref.dtype)


# ---------------------------------------------------------------------------
# Wrapper: padding, tiling, pallas_call
# ---------------------------------------------------------------------------
def mlp_forward(x, prepared, *, act_func_hidden, act_func_last,
                batch_tile=None, approx_gelu=False):
    """Fused MLP forward pass.

    Args:
      x: [B, dim_in] input.
      prepared: output of prepare_mlp_params (cached across calls).
      act_func_hidden / act_func_last: activation name strings (last may be None).
      batch_tile: optional batch tile override (rounded up to a multiple of 16).
    """
    flat_params = prepared["flat_params"]
    dims = prepared["dims"]
    dims_p = prepared["dims_p"]
    param_dtype = prepared["param_dtype"]
    n_layers = prepared["n_layers"]

    B, dim_in = x.shape
    assert dim_in == dims[0], "input feature dim does not match prepared params"
    dim_out = dims[-1]
    out_dtype = x.dtype

    act_hidden = _get_act_func(act_func_hidden, approx_gelu)
    act_last = _get_act_func(act_func_last, approx_gelu)

    vmem_cap, is_v7, is_v5e = _chip_info()
    vmem_budget = min(int(vmem_cap * 0.85), vmem_cap - 8 * 1024 * 1024)
    carry_dtype = jnp.float32 if is_v5e else param_dtype
    single_buf = _single_buffer_supported()

    param_bytes = sum(int(p.size) * p.dtype.itemsize for p in flat_params)
    resident_param_bytes = param_bytes if single_buf else 2 * param_bytes

    # ---- batch tile sizing --------------------------------------------------
    B_al = _round_up(B, _BATCH_ALIGN)
    if batch_tile is None:
        base = 512 if is_v7 else 1024          # bigger tiles on 128 MiB parts
        batch_tile = min(base, B_al)
        if is_v7 and B_al > _BATCH_ALIGN:
            # >=2-step parallel grid so both v7x TensorCores get work.
            half = _round_up(pl.cdiv(B_al, 2), _BATCH_ALIGN)
            batch_tile = min(batch_tile, max(half, _BATCH_ALIGN))
    batch_tile = max(_BATCH_ALIGN, _round_up(int(batch_tile), _BATCH_ALIGN))

    def _vmem_est(bt):
        in_bytes = 2 * param_dtype.itemsize * bt * dims_p[0]            # x dbl buf
        out_bytes = 2 * jnp.dtype(out_dtype).itemsize * bt * dims_p[-1]  # out dbl buf
        act_bytes = 3 * 4 * bt * max(dims_p)                             # f32 temporaries
        return in_bytes + out_bytes + act_bytes + resident_param_bytes

    while batch_tile > _BATCH_ALIGN and _vmem_est(batch_tile) > vmem_budget:
        batch_tile = max(_BATCH_ALIGN, _round_up(batch_tile // 2, _BATCH_ALIGN))
    if _vmem_est(batch_tile) > vmem_budget:
        # TODO(synk): weight-tiled fallback (out-features grid axis /
        # pltpu.emit_pipeline over K) for models whose resident params fit
        # v5e/v6e (128 MiB) but not v7x (64 MiB).
        raise ValueError(
            "MLP parameters do not fit the per-core VMEM budget "
            f"({param_bytes} bytes vs budget {vmem_budget}); weight-tiled "
            "path not implemented.")

    B_p = _round_up(B, batch_tile)
    grid = (B_p // batch_tile,)

    # ---- pad input (built directly in param_dtype; no in-kernel upcast) -----
    x_p = jnp.zeros((B_p, dims_p[0]), param_dtype)
    x_p = x_p.at[:B, :dim_in].set(jnp.asarray(x, param_dtype))

    # ---- scheduling hints ----------------------------------------------------
    flops = 2 * B_p * sum(dims_p[i] * dims_p[i + 1] for i in range(n_layers))
    flops += 2 * B_p * sum(dims_p[1:])  # bias add + activation (rough)
    transcendentals = B_p * (
        _ACT_TRANSCENDENTALS.get(act_func_hidden, 0) * sum(dims_p[1:-1])
        + _ACT_TRANSCENDENTALS.get(act_func_last, 0) * dims_p[-1])
    bytes_accessed = (int(x_p.size) * param_dtype.itemsize + param_bytes
                      + B_p * dims_p[-1] * jnp.dtype(out_dtype).itemsize)
    cost = pl.CostEstimate(flops=int(flops),
                           transcendentals=int(transcendentals),
                           bytes_accessed=int(bytes_accessed))

    vmem_limit = int(min(vmem_budget,
                         max(_vmem_est(batch_tile) * 5 // 4, 32 * 1024 * 1024)))

    kernel = functools.partial(
        _mlp_kernel, n_layers=n_layers, act_hidden=act_hidden,
        act_last=act_last, carry_dtype=carry_dtype)

    in_specs = [pl.BlockSpec((batch_tile, dims_p[0]), lambda i: (i, 0))]
    for p in flat_params:
        if single_buf:
            # Constant block across the grid -> one VMEM buffer is enough.
            spec = pl.BlockSpec(p.shape, lambda i: (0, 0),
                                pipeline_mode=pl.Buffered(1))
        else:
            spec = pl.BlockSpec(p.shape, lambda i: (0, 0))
        in_specs.append(spec)
    out_spec = pl.BlockSpec((batch_tile, dims_p[-1]), lambda i: (i, 0))

    out_p = pl.pallas_call(
        kernel,
        out_shape=jax.ShapeDtypeStruct((B_p, dims_p[-1]), out_dtype),
        grid_spec=pltpu.PrefetchScalarGridSpec(
            num_scalar_prefetch=0,
            grid=grid,
            in_specs=in_specs,
            out_specs=out_spec,
        ),
        compiler_params=pltpu.CompilerParams(
            dimension_semantics=("parallel",),
            vmem_limit_bytes=vmem_limit,
        ),
        cost_estimate=cost,
    )(x_p, *flat_params)

    return out_p[:B, :dim_out]


# ---------------------------------------------------------------------------
# Deterministic synthetic parameter init (mirrors MLP.__init__ shapes;
# initialize_weights zeros 1-D params, so biases start at zero).
# ---------------------------------------------------------------------------
def build_mlp_params(key, dim_in, hidden_layers, dim_out, out_layer_gain=0.01):
    dims = [dim_in] + list(hidden_layers) + [dim_out]
    weights, biases = [], []
    for i in range(len(dims) - 1):
        key, sub = jax.random.split(key)
        fan_in, fan_out = dims[i], dims[i + 1]
        scale = (2.0 / fan_in) ** 0.5
        if i == len(dims) - 2:
            scale *= out_layer_gain  # out_layer_gain applied to output layer
        w = scale * jax.random.normal(sub, (fan_out, fan_in), dtype=jnp.float32)
        b = jnp.zeros((fan_out,), dtype=jnp.float32)
        weights.append(w)
        biases.append(b)
    return weights, biases


# ---------------------------------------------------------------------------
# Pure-JAX reference for validation
# ---------------------------------------------------------------------------
def mlp_reference(x, weights, biases, act_func_hidden, act_func_last):
    act_h = _get_act_func(act_func_hidden)
    act_l = _get_act_func(act_func_last)
    h = x
    for i in range(len(weights) - 1):
        h = act_h(h @ weights[i].T + biases[i])
    h = h @ weights[-1].T + biases[-1]
    if act_l is not None:
        h = act_l(h)
    return h


if __name__ == "__main__":
    # Small shapes consistent with the module: MLP(dim_in=16, hidden=[32, 32], dim_out=8)
    dim_in, hidden_layers, dim_out = 16, [32, 32], 8
    batch = 20                       # not a tile multiple -> exercises batch padding
    act_func_hidden = "relu"
    act_func_last = "tanh"

    key = jax.random.PRNGKey(0)
    key, xkey = jax.random.split(key)
    x = jax.random.normal(xkey, (batch, dim_in), dtype=jnp.float32)

    weights, biases = build_mlp_params(key, dim_in, hidden_layers, dim_out)
    # The module zero-inits biases; use small non-zero biases here so the
    # bias-broadcast path of the kernel is actually exercised by the check.
    biases = [0.1 * jax.random.normal(jax.random.fold_in(key, i), b.shape,
                                      dtype=jnp.float32)
              for i, b in enumerate(biases)]

    # One-time parameter preparation (cached and reused across forwards).
    prepared = prepare_mlp_params(weights, biases, param_dtype=jnp.bfloat16)

    out = mlp_forward(
        x, prepared,
        act_func_hidden=act_func_hidden,
        act_func_last=act_func_last,
        batch_tile=16,              # small tile -> multi-step parallel grid
    )
    out = jax.block_until_ready(out)

    ref = mlp_reference(x, weights, biases, act_func_hidden, act_func_last)
    assert out.shape == (batch, dim_out)
    # bf16 MXU inputs (f32 accumulation) -> loosen tolerance vs f32 reference.
    assert jnp.allclose(out, ref, atol=1e-2, rtol=1e-2), \
        "Pallas output mismatch vs reference"

    print("KERNEL_OK")
</pallas_src>

<mosaic_0001>
module attributes {stable_mosaic.version = 11 : i64} {
  func.func @_copy(%arg0: i32, %arg1: memref<8x128xf32, #tpu.memory_space<vmem>>, %arg2: memref<8x128xf32, #tpu.memory_space<vmem>>) attributes {dimension_semantics = [#tpu.dimension_semantics<arbitrary>], iteration_bounds = array<i64: 1>, scalar_prefetch = 0 : i64, scratch_operands = 0 : i64, tpu.core_type = #tpu.core_type<tc>, window_params = [{pipeline_mode = #tpu.pipeline_mode<synchronous>, transform_indices = @transform_0, window_bounds = array<i64: 8, 128>}, {pipeline_mode = #tpu.pipeline_mode<synchronous>, transform_indices = @transform_1, window_bounds = array<i64: 8, 128>}]} {
    %c0 = arith.constant 0 : index
    %c0_0 = arith.constant 0 : index
    %0 = vector.load %arg1[%c0, %c0_0] : memref<8x128xf32, #tpu.memory_space<vmem>>, vector<8x128xf32>
    %c0_1 = arith.constant 0 : index
    %c0_2 = arith.constant 0 : index
    %1 = vector.load %arg2[%c0_1, %c0_2] : memref<8x128xf32, #tpu.memory_space<vmem>>, vector<8x128xf32>
    tpu.vector_store %arg2[%c0_1, %c0_2], %0 {strides = array<i32>} : memref<8x128xf32, #tpu.memory_space<vmem>>, vector<8x128xf32>,
    return
  }
  func.func @transform_0(%arg0: i32) -> (i32, i32) {
    %c0_i32 = arith.constant 0 : i32
    %c0_i32_0 = arith.constant 0 : i32
    %c0_i32_1 = arith.constant 0 : i32
    return %c0_i32, %c0_i32_0 : i32, i32
  }
  func.func @transform_1(%arg0: i32) -> (i32, i32) {
    %c0_i32 = arith.constant 0 : i32
    %c0_i32_0 = arith.constant 0 : i32
    %c0_i32_1 = arith.constant 0 : i32
    return %c0_i32, %c0_i32_0 : i32, i32
  }
}

module attributes {stable_mosaic.version = 11 : i64} {
  func.func @_mlp_kernel(%arg0: i32, %arg1: memref<16x128xbf16, #tpu.memory_space<vmem>>, %arg2: memref<128x128xbf16, #tpu.memory_space<vmem>>, %arg3: memref<1x128xf32, #tpu.memory_space<vmem>>, %arg4: memref<128x128xbf16, #tpu.memory_space<vmem>>, %arg5: memref<1x128xf32, #tpu.memory_space<vmem>>, %arg6: memref<128x128xbf16, #tpu.memory_space<vmem>>, %arg7: memref<1x128xf32, #tpu.memory_space<vmem>>, %arg8: memref<16x128xf32, #tpu.memory_space<vmem>>) attributes {dimension_semantics = [#tpu.dimension_semantics<parallel>], iteration_bounds = array<i64: 2>, scalar_prefetch = 0 : i64, scratch_operands = 0 : i64, tpu.core_type = #tpu.core_type<tc>, window_params = [{transform_indices = @transform_0, window_bounds = array<i64: 16, 128>}, {pipeline_mode = #tpu.pipeline_mode<synchronous>, transform_indices = @transform_1, window_bounds = array<i64: 128, 128>}, {pipeline_mode = #tpu.pipeline_mode<synchronous>, transform_indices = @transform_2, window_bounds = array<i64: 1, 128>}, {pipeline_mode = #tpu.pipeline_mode<synchronous>, transform_indices = @transform_3, window_bounds = array<i64: 128, 128>}, {pipeline_mode = #tpu.pipeline_mode<synchronous>, transform_indices = @transform_4, window_bounds = array<i64: 1, 128>}, {pipeline_mode = #tpu.pipeline_mode<synchronous>, transform_indices = @transform_5, window_bounds = array<i64: 128, 128>}, {pipeline_mode = #tpu.pipeline_mode<synchronous>, transform_indices = @transform_6, window_bounds = array<i64: 1, 128>}, {transform_indices = @transform_7, window_bounds = array<i64: 16, 128>}]} {
    %c0 = arith.constant 0 : index
    %c0_0 = arith.constant 0 : index
    %0 = vector.load %arg1[%c0, %c0_0] : memref<16x128xbf16, #tpu.memory_space<vmem>>, vector<16x128xbf16>
    %c0_1 = arith.constant 0 : index
    %c0_2 = arith.constant 0 : index
    %1 = vector.load %arg2[%c0_1, %c0_2] : memref<128x128xbf16, #tpu.memory_space<vmem>>, vector<128x128xbf16>
    %cst = arith.constant dense<0.000000e+00> : vector<16x128xf32>
    %2 = tpu.matmul %0, %1, %cst {dimension_numbers = #tpu.dot_dimension_numbers<[1], [0], [0], [1], [0, 0, 1, 1], [], []>} : vector<16x128xbf16>, vector<128x128xbf16>, vector<16x128xf32> -> vector<16x128xf32>
    %c0_3 = arith.constant 0 : index
    %c0_4 = arith.constant 0 : index
    %3 = vector.load %arg3[%c0_3, %c0_4] : memref<1x128xf32, #tpu.memory_space<vmem>>, vector<1x128xf32>
    %4 = vector.broadcast %3 : vector<1x128xf32> to vector<16x128xf32>
    %5 = arith.addf %2, %4 : vector<16x128xf32>
    %cst_5 = arith.constant 0.000000e+00 : f32
    %6 = vector.broadcast %cst_5 : f32 to vector<16x128xf32>
    %7 = arith.maximumf %5, %6 : vector<16x128xf32>
    %8 = arith.truncf %7 : vector<16x128xf32> to vector<16x128xbf16>
    %c0_6 = arith.constant 0 : index
    %c0_7 = arith.constant 0 : index
    %9 = vector.load %arg4[%c0_6, %c0_7] : memref<128x128xbf16, #tpu.memory_space<vmem>>, vector<128x128xbf16>
    %cst_8 = arith.constant dense<0.000000e+00> : vector<16x128xf32>
    %10 = tpu.matmul %8, %9, %cst_8 {dimension_numbers = #tpu.dot_dimension_numbers<[1], [0], [0], [1], [0, 0, 1, 1], [], []>} : vector<16x128xbf16>, vector<128x128xbf16>, vector<16x128xf32> -> vector<16x128xf32>
    %c0_9 = arith.constant 0 : index
    %c0_10 = arith.constant 0 : index
    %11 = vector.load %arg5[%c0_9, %c0_10] : memref<1x128xf32, #tpu.memory_space<vmem>>, vector<1x128xf32>
    %12 = vector.broadcast %11 : vector<1x128xf32> to vector<16x128xf32>
    %13 = arith.addf %10, %12 : vector<16x128xf32>
    %cst_11 = arith.constant 0.000000e+00 : f32
    %14 = vector.broadcast %cst_11 : f32 to vector<16x128xf32>
    %15 = arith.maximumf %13, %14 : vector<16x128xf32>
    %16 = arith.truncf %15 : vector<16x128xf32> to vector<16x128xbf16>
    %c0_12 = arith.constant 0 : index
    %c0_13 = arith.constant 0 : index
    %17 = vector.load %arg6[%c0_12, %c0_13] : memref<128x128xbf16, #tpu.memory_space<vmem>>, vector<128x128xbf16>
    %cst_14 = arith.constant dense<0.000000e+00> : vector<16x128xf32>
    %18 = tpu.matmul %16, %17, %cst_14 {dimension_numbers = #tpu.dot_dimension_numbers<[1], [0], [0], [1], [0, 0, 1, 1], [], []>} : vector<16x128xbf16>, vector<128x128xbf16>, vector<16x128xf32> -> vector<16x128xf32>
    %c0_15 = arith.constant 0 : index
    %c0_16 = arith.constant 0 : index
    %19 = vector.load %arg7[%c0_15, %c0_16] : memref<1x128xf32, #tpu.memory_space<vmem>>, vector<1x128xf32>
    %20 = vector.broadcast %19 : vector<1x128xf32> to vector<16x128xf32>
    %21 = arith.addf %18, %20 : vector<16x128xf32>
    %22 = math.tanh %21 : vector<16x128xf32>
    %c0_17 = arith.constant 0 : index
    %c0_18 = arith.constant 0 : index
    %23 = vector.load %arg8[%c0_17, %c0_18] : memref<16x128xf32, #tpu.memory_space<vmem>>, vector<16x128xf32>
    tpu.vector_store %arg8[%c0_17, %c0_18], %22 {strides = array<i32>} : memref<16x128xf32, #tpu.memory_space<vmem>>, vector<16x128xf32>,
    return
  }
  func.func @transform_0(%arg0: i32) -> (i32, i32) {
    %c0_i32 = arith.constant 0 : i32
    %c0_i32_0 = arith.constant 0 : i32
    return %arg0, %c0_i32 : i32, i32
  }
  func.func @transform_1(%arg0: i32) -> (i32, i32) {
    %c0_i32 = arith.constant 0 : i32
    %c0_i32_0 = arith.constant 0 : i32
    %c0_i32_1 = arith.constant 0 : i32
    return %c0_i32, %c0_i32_0 : i32, i32
  }
  func.func @transform_2(%arg0: i32) -> (i32, i32) {
    %c0_i32 = arith.constant 0 : i32
    %c0_i32_0 = arith.constant 0 : i32
    %c0_i32_1 = arith.constant 0 : i32
    return %c0_i32, %c0_i32_0 : i32, i32
  }
  func.func @transform_3(%arg0: i32) -> (i32, i32) {
    %c0_i32 = arith.constant 0 : i32
    %c0_i32_0 = arith.constant 0 : i32
    %c0_i32_1 = arith.constant 0 : i32
    return %c0_i32, %c0_i32_0 : i32, i32
  }
  func.func @transform_4(%arg0: i32) -> (i32, i32) {
    %c0_i32 = arith.constant 0 : i32
    %c0_i32_0 = arith.constant 0 : i32
    %c0_i32_1 = arith.constant 0 : i32
    return %c0_i32, %c0_i32_0 : i32, i32
  }
  func.func @transform_5(%arg0: i32) -> (i32, i32) {
    %c0_i32 = arith.constant 0 : i32
    %c0_i32_0 = arith.constant 0 : i32
    %c0_i32_1 = arith.constant 0 : i32
    return %c0_i32, %c0_i32_0 : i32, i32
  }
  func.func @transform_6(%arg0: i32) -> (i32, i32) {
    %c0_i32 = arith.constant 0 : i32
    %c0_i32_0 = arith.constant 0 : i32
    %c0_i32_1 = arith.constant 0 : i32
    return %c0_i32, %c0_i32_0 : i32, i32
  }
  func.func @transform_7(%arg0: i32) -> (i32, i32) {
    %c0_i32 = arith.constant 0 : i32
    %c0_i32_0 = arith.constant 0 : i32
    return %arg0, %c0_i32 : i32, i32
  }
}

</mosaic_0001>

<llo_original>
// kernel: tpu_custom_call.1
$region0: #{tpu_custom_call.1}
  #allocation0 [shape = 'u32[]', space=smem, size = 0x4, offset = 0x4, fixed_abs, tag = 'smem constant byte address 0x4 - core index']
  #allocation1 [shape = 'u32[72,128]{1,0:T(1,128)}', space=vmem, size = 0x9000, scoped, tag = 'internal scratch']
  %s0 = inlined_call_operand.hbm [shape: f32[8,128], index: 0, kind: input, shape index: {}]
  %s1 = inlined_call_operand.hbm [shape: f32[8,128], index: 1, kind: output, shape index: {}]
  %s2 = sld [smem:[#allocation0]]
  $region18: #{tpu_custom_call.1} parent=0
    _
  %s4 = ssub.s32 1, %s2
  %s5 = scalar_select 0, %s4, %s2
  $region1: #{tpu_custom_call.1} parent=0
    #allocation2 [shape = 'u8[4096]{0}', space=vmem, size = 0x1000, scoped, tag = 'input window, operand 0, single buffered']
    #allocation3 [shape = 's32[1]{0}', space=sflag, size = 0x4, scoped, tag = 'scoped memory for tpu_custom_call.1']
    #allocation4 [shape = 's32[1]{0}', space=sflag, size = 0x4, scoped, tag = 'scoped memory for tpu_custom_call.1']
    #allocation5 [shape = 'u8[4096]{0}', space=vmem, size = 0x1000, scoped, tag = 'output window, operand 0, single buffered']
    %6 = vsyncpa [#allocation3], 0
    %7 = vsyncpa [#allocation4], 0
    // Predicated region
    $region2: #{tpu_custom_call.1} parent=1 // pred_check
      _
    $region3: #{tpu_custom_call.1} parent=1 // pred_check_branch
      %9 = sbr.rel (0) target = $region5
    $region4: #{tpu_custom_call.1} parent=1 // pred_region
      %11 = vsyncadd [#allocation3], 0
      %s13 = sshll.u32 %s0, 4
      %s14 = int_to_ptr.hbm [resolvable:$true] %s13
      %s15 = sshll.u32 [#allocation2], 4
      %s16 = int_to_ptr.vmem [resolvable:$true] %s15
      %18 = dma.hbm_to_vmem [thread:$0]  %s14, 128, %s16, [#allocation3]
    $region5: #{tpu_custom_call.1} parent=1 // pred_fallthru
      _
    // Predicated region
    $region6: #{tpu_custom_call.1} parent=1 // pred_check
      _
    $region7: #{tpu_custom_call.1} parent=1 // pred_check_branch
      %20 = sbr.rel (0) target = $region9
    $region8: #{tpu_custom_call.1} parent=1 // pred_region
      %22 = dma.done [#allocation3], 128
    $region9: #{tpu_custom_call.1} parent=1 // pred_fallthru
      _
    %v23 = vld [vmem:[#allocation2] sm:$0xff]
    %24 = vst [vmem:[#allocation5] sm:$0xff] %v23
    // Predicated region
    $region10: #{tpu_custom_call.1} parent=1 // pred_check
      _
    $region11: #{tpu_custom_call.1} parent=1 // pred_check_branch
      %26 = sbr.rel (0) target = $region13
    $region12: #{tpu_custom_call.1} parent=1 // pred_region
      %28 = vsyncadd [#allocation4], 0
      %s30 = sshll.u32 [#allocation5], 4
      %s31 = int_to_ptr.vmem [resolvable:$true] %s30
      %s32 = sshll.u32 %s1, 4
      %s33 = int_to_ptr.hbm [resolvable:$true] %s32
      %35 = dma.vmem_to_hbm [thread:$0]  %s31, 128, %s33, [#allocation4]
    $region13: #{tpu_custom_call.1} parent=1 // pred_fallthru
      _
    // Predicated region
    $region14: #{tpu_custom_call.1} parent=1 // pred_check
      _
    $region15: #{tpu_custom_call.1} parent=1 // pred_check_branch
      %37 = sbr.rel (0) target = $region17
    $region16: #{tpu_custom_call.1} parent=1 // pred_region
      %39 = dma.done [#allocation4], 128
    $region17: #{tpu_custom_call.1} parent=1 // pred_fallthru
      _
    %40 = vsyncpa [#allocation3], 1
    %41 = vsyncpa [#allocation4], 1

// kernel: tpu_custom_call.1
$region0: #{tpu_custom_call.1}
  #allocation0 [shape = 'u32[]', space=smem, size = 0x4, offset = 0x4, fixed_abs, tag = 'smem constant byte address 0x4 - core index']
  #allocation1 [shape = 'u32[72,128]{1,0:T(1,128)}', space=vmem, size = 0x9000, scoped, tag = 'internal scratch']
  %s0 = inlined_call_operand.hbm [shape: bf16[32,128], index: 0, kind: input, shape index: {}]
  %s1 = inlined_call_operand.hbm [shape: bf16[128,128], index: 1, kind: input, shape index: {}]
  %s2 = inlined_call_operand.vmem [shape: f32[1,128], index: 2, kind: input, shape index: {}]
  %s3 = inlined_call_operand.hbm [shape: bf16[128,128], index: 3, kind: input, shape index: {}]
  %s4 = inlined_call_operand.vmem [shape: f32[1,128], index: 4, kind: input, shape index: {}]
  %s5 = inlined_call_operand.hbm [shape: bf16[128,128], index: 5, kind: input, shape index: {}]
  %s6 = inlined_call_operand.vmem [shape: f32[1,128], index: 6, kind: input, shape index: {}]
  %s7 = inlined_call_operand.hbm [shape: f32[32,128], index: 7, kind: output, shape index: {}]
  %s8 = sld [smem:[#allocation0]]
  $region77: #{tpu_custom_call.1} parent=0
    _
  %s10 = ssub.s32 1, %s8
  %s11 = scalar_select 0, %s10, %s8
  $region1: #{tpu_custom_call.1} parent=0
    #allocation2 [shape = 'u8[8192]{0}', space=vmem, size = 0x2000, scoped, tag = 'input window, operand 0']
    #allocation3 [shape = 's32[2]{0}', space=sflag, size = 0x8, scoped, tag = 'scoped memory for tpu_custom_call.1']
    #allocation4 [shape = 's32[2]{0}', space=sflag, size = 0x8, scoped, tag = 'scoped memory for tpu_custom_call.1']
    #allocation5 [shape = 'u8[32768]{0}', space=vmem, size = 0x8000, scoped, tag = 'input window, operand 1, single buffered']
    #allocation6 [shape = 's32[1]{0}', space=sflag, size = 0x4, scoped, tag = 'scoped memory for tpu_custom_call.1']
    #allocation7 [shape = 'u8[32768]{0}', space=vmem, size = 0x8000, scoped, tag = 'input window, operand 3, single buffered']
    #allocation8 [shape = 'u8[32768]{0}', space=vmem, size = 0x8000, scoped, tag = 'input window, operand 5, single buffered']
    #allocation9 [shape = 's32[1]{0}', space=sflag, size = 0x4, scoped, tag = 'scoped memory for tpu_custom_call.1']
    #allocation10 [shape = 'u8[16384]{0}', space=vmem, size = 0x4000, scoped, tag = 'output window, operand 0']
    %12 = vsyncpa [#allocation3], 0
    %s13 = scalar_lea.sflag [#allocation3], 1
    %14 = vsyncpa %s13, 0
    %15 = vsyncpa [#allocation6], 0
    %16 = vsyncpa [#allocation9], 0
    %17 = vsyncpa [#allocation4], 0
    %s18 = scalar_lea.sflag [#allocation4], 1
    %19 = vsyncpa %s18, 0
    loop: start=0, step=1, limit=4
    $region2: #{tpu_custom_call.1} parent=1 // loop_pre_header
      _
    $region3: #{tpu_custom_call.1} parent=1 // loop_header
      %s21 = sphi 0, %s25
      %p22 = scmp.ge.s32.totalorder %s21, 4
      %s31 = sphi 0, %s33
      %s34 = sphi 0, %s31
      %s35 = sphi 0, %s34
      %s51 = sphi 0, %s35
      %s55 = sphi 0, %s55
      %s57 = sphi 0, %s55
      %s58 = sphi 0, %s57
      %s72 = sphi 0, %s58
      %s76 = sphi 0, %s76
      %s78 = sphi 0, %s76
      %s79 = sphi 0, %s78
      %s93 = sphi 0, %s79
      %s97 = sphi 0, %s97
      %s99 = sphi 0, %s97
      %s100 = sphi 0, %s99
      %s114 = sphi 0, %s100
      %s118 = sphi 0, %s118
      %s120 = sphi 0, %s118
      %s121 = sphi 0, %s120
      %s135 = sphi 0, %s121
      %s139 = sphi 0, %s139
      %s141 = sphi 0, %s139
      %s142 = sphi 0, %s141
      %s156 = sphi 0, %s142
      %s160 = sphi 0, %s160
      %s162 = sphi 0, %s160
      %s163 = sphi 0, %s162
      %s177 = sphi 0, %s163
      %s183 = sphi 0, %s185
      %s186 = sphi 0, %s183
      %s187 = sphi 0, %s186
      %s203 = sphi 0, %s187
    $region4: #{tpu_custom_call.1} parent=1 // loop_header_branch
      %24 = sbr.rel (%p22) target = $region8
    $region5: #{tpu_custom_call.1} parent=1 // loop_body
      %s26 = ssub.s32 %s21, 1
      %s27 = ssub.s32 %s21, 2
      %s28 = sadd.s32 %s21, 1
      %s29 = ssub.s32 %s21, %s28
      %p30 = scmp.eq.s32.totalorder %s29, 0
      %s32 = sadd.s32 %s31, 1
      %s33 = scalar_select %p30, %s31, %s32
      %p36 = pneg %p30
      %p37 = scmp.eq.s32.totalorder %s21, 1
      %p38 = por %p36, %p37
      %p39 = scmp.ne.s32.totalorder %s31, %s34
      %p40 = scmp.eq.s32.totalorder %s21, 0
      %p41 = por %p39, %p40
      %p42 = scmp.ne.s32.totalorder %s31, %s34
      %p43 = scmp.eq.s32.totalorder %s26, 1
      %p44 = por %p42, %p43
      %p45 = scmp.ne.s32.totalorder %s34, %s35
      %p46 = scmp.eq.s32.totalorder %s26, 0
      %p47 = por %p45, %p46
      %p48 = scmp.ne.s32.totalorder %s34, %s35
      %p49 = scmp.eq.s32.totalorder %s27, 1
      %p50 = por %p48, %p49
      %p52 = scmp.ne.s32.totalorder %s35, %s51
      %p53 = scmp.eq.s32.totalorder %s27, 0
      %p54 = por %p52, %p53
      %s56 = sadd.s32 %s55, 1
      %p59 = scmp.eq.s32.totalorder %s21, 1
      %p60 = scmp.ne.s32.totalorder %s55, %s57
      %p61 = scmp.eq.s32.totalorder %s21, 0
      %p62 = por %p60, %p61
      %p63 = scmp.ne.s32.totalorder %s55, %s57
      %p64 = scmp.eq.s32.totalorder %s26, 1
      %p65 = por %p63, %p64
      %p66 = scmp.ne.s32.totalorder %s57, %s58
      %p67 = scmp.eq.s32.totalorder %s26, 0
      %p68 = por %p66, %p67
      %p69 = scmp.ne.s32.totalorder %s57, %s58
      %p70 = scmp.eq.s32.totalorder %s27, 1
      %p71 = por %p69, %p70
      %p73 = scmp.ne.s32.totalorder %s58, %s72
      %p74 = scmp.eq.s32.totalorder %s27, 0
      %p75 = por %p73, %p74
      %s77 = sadd.s32 %s76, 1
      %p80 = scmp.eq.s32.totalorder %s21, 1
      %p81 = scmp.ne.s32.totalorder %s76, %s78
      %p82 = scmp.eq.s32.totalorder %s21, 0
      %p83 = por %p81, %p82
      %p84 = scmp.ne.s32.totalorder %s76, %s78
      %p85 = scmp.eq.s32.totalorder %s26, 1
      %p86 = por %p84, %p85
      %p87 = scmp.ne.s32.totalorder %s78, %s79
      %p88 = scmp.eq.s32.totalorder %s26, 0
      %p89 = por %p87, %p88
      %p90 = scmp.ne.s32.totalorder %s78, %s79
      %p91 = scmp.eq.s32.totalorder %s27, 1
      %p92 = por %p90, %p91
      %p94 = scmp.ne.s32.totalorder %s79, %s93
      %p95 = scmp.eq.s32.totalorder %s27, 0
      %p96 = por %p94, %p95
      %s98 = sadd.s32 %s97, 1
      %p101 = scmp.eq.s32.totalorder %s21, 1
      %p102 = scmp.ne.s32.totalorder %s97, %s99
      %p103 = scmp.eq.s32.totalorder %s21, 0
      %p104 = por %p102, %p103
      %p105 = scmp.ne.s32.totalorder %s97, %s99
      %p106 = scmp.eq.s32.totalorder %s26, 1
      %p107 = por %p105, %p106
      %p108 = scmp.ne.s32.totalorder %s99, %s100
      %p109 = scmp.eq.s32.totalorder %s26, 0
      %p110 = por %p108, %p109
      %p111 = scmp.ne.s32.totalorder %s99, %s100
      %p112 = scmp.eq.s32.totalorder %s27, 1
      %p113 = por %p111, %p112
      %p115 = scmp.ne.s32.totalorder %s100, %s114
      %p116 = scmp.eq.s32.totalorder %s27, 0
      %p117 = por %p115, %p116
      %s119 = sadd.s32 %s118, 1
      %p122 = scmp.eq.s32.totalorder %s21, 1
      %p123 = scmp.ne.s32.totalorder %s118, %s120
      %p124 = scmp.eq.s32.totalorder %s21, 0
      %p125 = por %p123, %p124
      %p126 = scmp.ne.s32.totalorder %s118, %s120
      %p127 = scmp.eq.s32.totalorder %s26, 1
      %p128 = por %p126, %p127
      %p129 = scmp.ne.s32.totalorder %s120, %s121
      %p130 = scmp.eq.s32.totalorder %s26, 0
      %p131 = por %p129, %p130
      %p132 = scmp.ne.s32.totalorder %s120, %s121
      %p133 = scmp.eq.s32.totalorder %s27, 1
      %p134 = por %p132, %p133
      %p136 = scmp.ne.s32.totalorder %s121, %s135
      %p137 = scmp.eq.s32.totalorder %s27, 0
      %p138 = por %p136, %p137
      %s140 = sadd.s32 %s139, 1
      %p143 = scmp.eq.s32.totalorder %s21, 1
      %p144 = scmp.ne.s32.totalorder %s139, %s141
      %p145 = scmp.eq.s32.totalorder %s21, 0
      %p146 = por %p144, %p145
      %p147 = scmp.ne.s32.totalorder %s139, %s141
      %p148 = scmp.eq.s32.totalorder %s26, 1
      %p149 = por %p147, %p148
      %p150 = scmp.ne.s32.totalorder %s141, %s142
      %p151 = scmp.eq.s32.totalorder %s26, 0
      %p152 = por %p150, %p151
      %p153 = scmp.ne.s32.totalorder %s141, %s142
      %p154 = scmp.eq.s32.totalorder %s27, 1
      %p155 = por %p153, %p154
      %p157 = scmp.ne.s32.totalorder %s142, %s156
      %p158 = scmp.eq.s32.totalorder %s27, 0
      %p159 = por %p157, %p158
      %s161 = sadd.s32 %s160, 1
      %p164 = scmp.eq.s32.totalorder %s21, 1
      %p165 = scmp.ne.s32.totalorder %s160, %s162
      %p166 = scmp.eq.s32.totalorder %s21, 0
      %p167 = por %p165, %p166
      %p168 = scmp.ne.s32.totalorder %s160, %s162
      %p169 = scmp.eq.s32.totalorder %s26, 1
      %p170 = por %p168, %p169
      %p171 = scmp.ne.s32.totalorder %s162, %s163
      %p172 = scmp.eq.s32.totalorder %s26, 0
      %p173 = por %p171, %p172
      %p174 = scmp.ne.s32.totalorder %s162, %s163
      %p175 = scmp.eq.s32.totalorder %s27, 1
      %p176 = por %p174, %p175
      %p178 = scmp.ne.s32.totalorder %s163, %s177
      %p179 = scmp.eq.s32.totalorder %s27, 0
      %p180 = por %p178, %p179
      %s181 = ssub.s32 %s21, %s28
      %p182 = scmp.eq.s32.totalorder %s181, 0
      %s184 = sadd.s32 %s183, 1
      %s185 = scalar_select %p182, %s183, %s184
      %p188 = pneg %p182
      %p189 = scmp.eq.s32.totalorder %s21, 1
      %p190 = por %p188, %p189
      %p191 = scmp.ne.s32.totalorder %s183, %s186
      %p192 = scmp.eq.s32.totalorder %s21, 0
      %p193 = por %p191, %p192
      %p194 = scmp.ne.s32.totalorder %s183, %s186
      %p195 = scmp.eq.s32.totalorder %s26, 1
      %p196 = por %p194, %p195
      %p197 = scmp.ne.s32.totalorder %s186, %s187
      %p198 = scmp.eq.s32.totalorder %s26, 0
      %p199 = por %p197, %p198
      %p200 = scmp.ne.s32.totalorder %s186, %s187
      %p201 = scmp.eq.s32.totalorder %s27, 1
      %p202 = por %p200, %p201
      %p204 = scmp.ne.s32.totalorder %s187, %s203
      %p205 = scmp.eq.s32.totalorder %s27, 0
      %p206 = por %p204, %p205
      %p207 = scmp.le.s32.totalorder 1, %s21
      %p208 = scmp.lt.s32.totalorder %s21, 3
      %p209 = pnand %p207, %p208
      %p210 = pneg %p209
      // Predicated region
      $region9: #{tpu_custom_call.1} parent=5 // pred_check
        _
      $region10: #{tpu_custom_call.1} parent=5 // pred_check_branch
        %212 = sbr.rel (%p209) target = $region12
      $region11: #{tpu_custom_call.1} parent=5 // pred_region
        %s213 = ssub.s32 %s21, 1
        // Predicated region
        $region13: #{tpu_custom_call.1} parent=11 // pred_check
          %p214 = pneg %p68
        $region14: #{tpu_custom_call.1} parent=11 // pred_check_branch
          %216 = sbr.rel (%p214) target = $region16
        $region15: #{tpu_custom_call.1} parent=11 // pred_region
          %218 = vsyncadd [#allocation6], 0
          %s219 = sshll.u32 %s1, 4
          %s220 = int_to_ptr.hbm [resolvable:$true] %s219
          %s221 = sshll.u32 [#allocation5], 4
          %s222 = int_to_ptr.vmem [resolvable:$true] %s221
          %227 = dma.hbm_to_vmem [thread:$0]  %s220, 1024, %s222, [#allocation6], 64, 64, 4
        $region16: #{tpu_custom_call.1} parent=11 // pred_fallthru
          _
        // Predicated region
        $region17: #{tpu_custom_call.1} parent=11 // pred_check
          %p228 = pneg %p89
        $region18: #{tpu_custom_call.1} parent=11 // pred_check_branch
          %230 = sbr.rel (%p228) target = $region20
        $region19: #{tpu_custom_call.1} parent=11 // pred_region
          _
        $region20: #{tpu_custom_call.1} parent=11 // pred_fallthru
          _
        // Predicated region
        $region21: #{tpu_custom_call.1} parent=11 // pred_check
          %p231 = pneg %p110
        $region22: #{tpu_custom_call.1} parent=11 // pred_check_branch
          %233 = sbr.rel (%p231) target = $region24
        $region23: #{tpu_custom_call.1} parent=11 // pred_region
          %235 = vsyncadd [#allocation6], 0
          %s236 = sshll.u32 %s3, 4
          %s237 = int_to_ptr.hbm [resolvable:$true] %s236
          %s238 = sshll.u32 [#allocation7], 4
          %s239 = int_to_ptr.vmem [resolvable:$true] %s238
          %244 = dma.hbm_to_vmem [thread:$0]  %s237, 1024, %s239, [#allocation6], 64, 64, 4
        $region24: #{tpu_custom_call.1} parent=11 // pred_fallthru
          _
        // Predicated region
        $region25: #{tpu_custom_call.1} parent=11 // pred_check
          %p245 = pneg %p131
        $region26: #{tpu_custom_call.1} parent=11 // pred_check_branch
          %247 = sbr.rel (%p245) target = $region28
        $region27: #{tpu_custom_call.1} parent=11 // pred_region
          _
        $region28: #{tpu_custom_call.1} parent=11 // pred_fallthru
          _
        // Predicated region
        $region29: #{tpu_custom_call.1} parent=11 // pred_check
          %p248 = pneg %p152
        $region30: #{tpu_custom_call.1} parent=11 // pred_check_branch
          %250 = sbr.rel (%p248) target = $region32
        $region31: #{tpu_custom_call.1} parent=11 // pred_region
          %252 = vsyncadd [#allocation9], 0
          %s253 = sshll.u32 %s5, 4
          %s254 = int_to_ptr.hbm [resolvable:$true] %s253
          %s255 = sshll.u32 [#allocation8], 4
          %s256 = int_to_ptr.vmem [resolvable:$true] %s255
          %261 = dma.hbm_to_vmem [thread:$0]  %s254, 1024, %s256, [#allocation9], 64, 64, 4
        $region32: #{tpu_custom_call.1} parent=11 // pred_fallthru
          _
        // Predicated region
        $region33: #{tpu_custom_call.1} parent=11 // pred_check
          %p262 = pneg %p173
        $region34: #{tpu_custom_call.1} parent=11 // pred_check_branch
          %264 = sbr.rel (%p262) target = $region36
        $region35: #{tpu_custom_call.1} parent=11 // pred_region
          _
        $region36: #{tpu_custom_call.1} parent=11 // pred_fallthru
          _
      $region12: #{tpu_custom_call.1} parent=5 // pred_fallthru
        _
      %p265 = scmp.lt.s32.totalorder %s21, 2
      // Predicated region
      $region37: #{tpu_custom_call.1} parent=5 // pred_check
        %p266 = pneg %p265
      $region38: #{tpu_custom_call.1} parent=5 // pred_check_branch
        %268 = sbr.rel (%p266) target = $region40
      $region39: #{tpu_custom_call.1} parent=5 // pred_region
        // Predicated region
        $region41: #{tpu_custom_call.1} parent=39 // pred_check
          %p269 = pneg %p41
        $region42: #{tpu_custom_call.1} parent=39 // pred_check_branch
          %271 = sbr.rel (%p269) target = $region44
        $region43: #{tpu_custom_call.1} parent=39 // pred_region
          %s272 = sand.u32 %s31, 1
          %s273 = scalar_lea.sflag [#allocation3], %s272
          %s274 = sand.u32 %s31, 1
          %s275 = smul.addr %s274, 8
          %s276 = scalar_lea.vmem [#allocation2], %s275
          %s277 = smul.u32 2, %s21
          %279 = vsyncadd %s273, 0
          %s280 = smul.addr %s277, 4
          %s281 = scalar_lea.hbm %s0, %s280
          %s282 = sshll.u32 %s281, 4
          %s283 = int_to_ptr.hbm [resolvable:$true] %s282
          %s284 = sshll.u32 %s276, 4
          %s285 = int_to_ptr.vmem [resolvable:$true] %s284
          %290 = dma.hbm_to_vmem [thread:$0]  %s283, 128, %s285, %s273, 64, 64, 4
        $region44: #{tpu_custom_call.1} parent=39 // pred_fallthru
          _
      $region40: #{tpu_custom_call.1} parent=5 // pred_fallthru
        _
      %p291 = scmp.le.s32.totalorder 1, %s21
      %p292 = scmp.lt.s32.totalorder %s21, 3
      %p293 = pnand %p291, %p292
      %p294 = pneg %p293
      // Predicated region
      $region45: #{tpu_custom_call.1} parent=5 // pred_check
        _
      $region46: #{tpu_custom_call.1} parent=5 // pred_check_branch
        %296 = sbr.rel (%p293) target = $region48
      $region47: #{tpu_custom_call.1} parent=5 // pred_region
        %s297 = ssub.s32 %s21, 1
        %s298 = sand.u32 %s34, 1
        %s299 = scalar_lea.sflag [#allocation3], %s298
        %s300 = sand.u32 %s34, 1
        %s301 = smul.addr %s300, 8
        %s302 = scalar_lea.vmem [#allocation2], %s301
        // Predicated region
        $region49: #{tpu_custom_call.1} parent=47 // pred_check
          %p303 = pneg %p47
        $region50: #{tpu_custom_call.1} parent=47 // pred_check_branch
          %305 = sbr.rel (%p303) target = $region52
        $region51: #{tpu_custom_call.1} parent=47 // pred_region
          %307 = dma.done %s299, 128
        $region52: #{tpu_custom_call.1} parent=47 // pred_fallthru
          _
        // Predicated region
        $region53: #{tpu_custom_call.1} parent=47 // pred_check
          %p308 = pneg %p68
        $region54: #{tpu_custom_call.1} parent=47 // pred_check_branch
          %310 = sbr.rel (%p308) target = $region56
        $region55: #{tpu_custom_call.1} parent=47 // pred_region
          %312 = dma.done [#allocation6], 1024
        $region56: #{tpu_custom_call.1} parent=47 // pred_fallthru
          _
        // Predicated region
        $region57: #{tpu_custom_call.1} parent=47 // pred_check
          %p313 = pneg %p110
        $region58: #{tpu_custom_call.1} parent=47 // pred_check_branch
          %315 = sbr.rel (%p313) target = $region60
        $region59: #{tpu_custom_call.1} parent=47 // pred_region
          %317 = dma.done [#allocation6], 1024
        $region60: #{tpu_custom_call.1} parent=47 // pred_fallthru
          _
        // Predicated region
        $region61: #{tpu_custom_call.1} parent=47 // pred_check
          %p318 = pneg %p152
        $region62: #{tpu_custom_call.1} parent=47 // pred_check_branch
          %320 = sbr.rel (%p318) target = $region64
        $region63: #{tpu_custom_call.1} parent=47 // pred_region
          %322 = dma.done [#allocation9], 1024
        $region64: #{tpu_custom_call.1} parent=47 // pred_fallthru
          _
        %s323 = sand.u32 %s34, 1
        %s324 = scalar_lea.sflag [#allocation3], %s323
        %s325 = sand.u32 %s34, 1
        %s326 = smul.addr %s325, 8
        %s327 = scalar_lea.vmem [#allocation2], %s326
        %p328 = pneg %p47
        %p329 = pneg %p44
        %p330 = pneg %p68
        %p331 = pneg %p65
        %p332 = pneg %p89
        %p333 = pneg %p86
        %p334 = pneg %p110
        %p335 = pneg %p107
        %p336 = pneg %p131
        %p337 = pneg %p128
        %p338 = pneg %p152
        %p339 = pneg %p149
        %p340 = pneg %p173
        %p341 = pneg %p170
        %p342 = pneg %p199
        %p343 = pneg %p196
        %s344 = sand.u32 %s186, 1
        %s345 = scalar_lea.sflag [#allocation4], %s344
        %s346 = sand.u32 %s186, 1
        %s347 = smul.addr %s346, 16
        %s348 = scalar_lea.vmem [#allocation10], %s347
        %s349 = smul.u32 2, %s26
        %s350 = smul.u32 2, %s26
        %v351 = vld [vmem:[%s302] sm:$0xf]
        %v352 = vld [vmem:[%s302 + $0x4] sm:$0xf]
        %v353 = vld [vmem:[#allocation5] sm:$0xf]
        %v354 = vld [vmem:[#allocation5 + $0x4] sm:$0xf]
        %v355 = vld [vmem:[#allocation5 + $0x8] sm:$0xf]
        %v356 = vld [vmem:[#allocation5 + $0xc] sm:$0xf]
        %v357 = vld [vmem:[#allocation5 + $0x10] sm:$0xf]
        %v358 = vld [vmem:[#allocation5 + $0x14] sm:$0xf]
        %v359 = vld [vmem:[#allocation5 + $0x18] sm:$0xf]
        %v360 = vld [vmem:[#allocation5 + $0x1c] sm:$0xf]
        %v361 = vld [vmem:[#allocation5 + $0x20] sm:$0xf]
        %v362 = vld [vmem:[#allocation5 + $0x24] sm:$0xf]
        %v363 = vld [vmem:[#allocation5 + $0x28] sm:$0xf]
        %v364 = vld [vmem:[#allocation5 + $0x2c] sm:$0xf]
        %v365 = vld [vmem:[#allocation5 + $0x30] sm:$0xf]
        %v366 = vld [vmem:[#allocation5 + $0x34] sm:$0xf]
        %v367 = vld [vmem:[#allocation5 + $0x38] sm:$0xf]
        %v368 = vld [vmem:[#allocation5 + $0x3c] sm:$0xf]
        %v369 = vld [vmem:[%s2] sm:$0x1]
        %v371 = vperm.slane %v369, 0
        %v375 = vunpack.c.l.b16 %v351
        %v376 = vunpack.c.l.b16 %v352
        %v377 = vpack.c.b16 %v376, %v375
        %v395 = vunpack.c.l.b16 %v353
        %v396 = vunpack.c.l.b16 %v354
        %v397 = vunpack.c.l.b16 %v355
        %v398 = vunpack.c.l.b16 %v356
        %v399 = vunpack.c.l.b16 %v357
        %v400 = vunpack.c.l.b16 %v358
        %v401 = vunpack.c.l.b16 %v359
        %v402 = vunpack.c.l.b16 %v360
        %v403 = vunpack.c.l.b16 %v361
        %v404 = vunpack.c.l.b16 %v362
        %v405 = vunpack.c.l.b16 %v363
        %v406 = vunpack.c.l.b16 %v364
        %v407 = vunpack.c.l.b16 %v365
        %v408 = vunpack.c.l.b16 %v366
        %v409 = vunpack.c.l.b16 %v367
        %v410 = vunpack.c.l.b16 %v368
        %v411 = vpack.c.b16 %v396, %v395
        %v412 = vpack.c.b16 %v398, %v397
        %v413 = vpack.c.b16 %v400, %v399
        %v414 = vpack.c.b16 %v402, %v401
        %v415 = vpack.c.b16 %v404, %v403
        %v416 = vpack.c.b16 %v406, %v405
        %v417 = vpack.c.b16 %v408, %v407
        %v418 = vpack.c.b16 %v410, %v409
        %427 = vmatpush.bf16.msra.mxu0 %v418
        %428 = vmatpush.bf16.msra.mxu0 %v417
        %429 = vmatpush.bf16.msra.mxu0 %v416
        %430 = vmatpush.bf16.msra.mxu0 %v415
        %431 = vmatpush.bf16.msra.mxu0 %v414
        %432 = vmatpush.bf16.msra.mxu0 %v413
        %433 = vmatpush.bf16.msra.mxu0 %v412
        %434 = vmatpush.bf16.msra.mxu0 %v411
        %435 = vmatmul.bf16.gmra.mxu0 %v377
        %v436 = vpop.f32.mrf.mxu0
        %v437 = vadd.f32 %v371, %v436
        %v438 = vpop.f32.mrf.mxu0
        %v439 = vadd.f32 %v371, %v438
        %440 = vdwg.mxu0
        %v441 = vmax.f32 %v437, 0.0
        %v442 = vmax.f32 %v439, 0.0
        %v443 = vpack.c.bf16 %v442, %v441
        %v444 = vld [vmem:[#allocation7] sm:$0xf]
        %v445 = vld [vmem:[#allocation7 + $0x4] sm:$0xf]
        %v446 = vld [vmem:[#allocation7 + $0x8] sm:$0xf]
        %v447 = vld [vmem:[#allocation7 + $0xc] sm:$0xf]
        %v448 = vld [vmem:[#allocation7 + $0x10] sm:$0xf]
        %v449 = vld [vmem:[#allocation7 + $0x14] sm:$0xf]
        %v450 = vld [vmem:[#allocation7 + $0x18] sm:$0xf]
        %v451 = vld [vmem:[#allocation7 + $0x1c] sm:$0xf]
        %v452 = vld [vmem:[#allocation7 + $0x20] sm:$0xf]
        %v453 = vld [vmem:[#allocation7 + $0x24] sm:$0xf]
        %v454 = vld [vmem:[#allocation7 + $0x28] sm:$0xf]
        %v455 = vld [vmem:[#allocation7 + $0x2c] sm:$0xf]
        %v456 = vld [vmem:[#allocation7 + $0x30] sm:$0xf]
        %v457 = vld [vmem:[#allocation7 + $0x34] sm:$0xf]
        %v458 = vld [vmem:[#allocation7 + $0x38] sm:$0xf]
        %v459 = vld [vmem:[#allocation7 + $0x3c] sm:$0xf]
        %v460 = vld [vmem:[%s4] sm:$0x1]
        %v462 = vperm.slane %v460, 0
        %v480 = vunpack.c.l.b16 %v444
        %v481 = vunpack.c.l.b16 %v445
        %v482 = vunpack.c.l.b16 %v446
        %v483 = vunpack.c.l.b16 %v447
        %v484 = vunpack.c.l.b16 %v448
        %v485 = vunpack.c.l.b16 %v449
        %v486 = vunpack.c.l.b16 %v450
        %v487 = vunpack.c.l.b16 %v451
        %v488 = vunpack.c.l.b16 %v452
        %v489 = vunpack.c.l.b16 %v453
        %v490 = vunpack.c.l.b16 %v454
        %v491 = vunpack.c.l.b16 %v455
        %v492 = vunpack.c.l.b16 %v456
        %v493 = vunpack.c.l.b16 %v457
        %v494 = vunpack.c.l.b16 %v458
        %v495 = vunpack.c.l.b16 %v459
        %v496 = vpack.c.b16 %v481, %v480
        %v497 = vpack.c.b16 %v483, %v482
        %v498 = vpack.c.b16 %v485, %v484
        %v499 = vpack.c.b16 %v487, %v486
        %v500 = vpack.c.b16 %v489, %v488
        %v501 = vpack.c.b16 %v491, %v490
        %v502 = vpack.c.b16 %v493, %v492
        %v503 = vpack.c.b16 %v495, %v494
        %512 = vmatpush.bf16.msra.mxu0 %v503
        %513 = vmatpush.bf16.msra.mxu0 %v502
        %514 = vmatpush.bf16.msra.mxu0 %v501
        %515 = vmatpush.bf16.msra.mxu0 %v500
        %516 = vmatpush.bf16.msra.mxu0 %v499
        %517 = vmatpush.bf16.msra.mxu0 %v498
        %518 = vmatpush.bf16.msra.mxu0 %v497
        %519 = vmatpush.bf16.msra.mxu0 %v496
        %520 = vmatmul.bf16.gmra.mxu0 %v443
        %v521 = vpop.f32.mrf.mxu0
        %v522 = vadd.f32 %v462, %v521
        %v523 = vpop.f32.mrf.mxu0
        %v524 = vadd.f32 %v462, %v523
        %525 = vdwg.mxu0
        %v526 = vmax.f32 %v522, 0.0
        %v527 = vmax.f32 %v524, 0.0
        %v528 = vpack.c.bf16 %v527, %v526
        %v529 = vld [vmem:[#allocation8] sm:$0xf]
        %v530 = vld [vmem:[#allocation8 + $0x4] sm:$0xf]
        %v531 = vld [vmem:[#allocation8 + $0x8] sm:$0xf]
        %v532 = vld [vmem:[#allocation8 + $0xc] sm:$0xf]
        %v533 = vld [vmem:[#allocation8 + $0x10] sm:$0xf]
        %v534 = vld [vmem:[#allocation8 + $0x14] sm:$0xf]
        %v535 = vld [vmem:[#allocation8 + $0x18] sm:$0xf]
        %v536 = vld [vmem:[#allocation8 + $0x1c] sm:$0xf]
        %v537 = vld [vmem:[#allocation8 + $0x20] sm:$0xf]
        %v538 = vld [vmem:[#allocation8 + $0x24] sm:$0xf]
        %v539 = vld [vmem:[#allocation8 + $0x28] sm:$0xf]
        %v540 = vld [vmem:[#allocation8 + $0x2c] sm:$0xf]
        %v541 = vld [vmem:[#allocation8 + $0x30] sm:$0xf]
        %v542 = vld [vmem:[#allocation8 + $0x34] sm:$0xf]
        %v543 = vld [vmem:[#allocation8 + $0x38] sm:$0xf]
        %v544 = vld [vmem:[#allocation8 + $0x3c] sm:$0xf]
        %v545 = vld [vmem:[%s6] sm:$0x1]
        %v547 = vperm.slane %v545, 0
        %v565 = vunpack.c.l.b16 %v529
        %v566 = vunpack.c.l.b16 %v530
        %v567 = vunpack.c.l.b16 %v531
        %v568 = vunpack.c.l.b16 %v532
        %v569 = vunpack.c.l.b16 %v533
        %v570 = vunpack.c.l.b16 %v534
        %v571 = vunpack.c.l.b16 %v535
        %v572 = vunpack.c.l.b16 %v536
        %v573 = vunpack.c.l.b16 %v537
        %v574 = vunpack.c.l.b16 %v538
        %v575 = vunpack.c.l.b16 %v539
        %v576 = vunpack.c.l.b16 %v540
        %v577 = vunpack.c.l.b16 %v541
        %v578 = vunpack.c.l.b16 %v542
        %v579 = vunpack.c.l.b16 %v543
        %v580 = vunpack.c.l.b16 %v544
        %v581 = vpack.c.b16 %v566, %v565
        %v582 = vpack.c.b16 %v568, %v567
        %v583 = vpack.c.b16 %v570, %v569
        %v584 = vpack.c.b16 %v572, %v571
        %v585 = vpack.c.b16 %v574, %v573
        %v586 = vpack.c.b16 %v576, %v575
        %v587 = vpack.c.b16 %v578, %v577
        %v588 = vpack.c.b16 %v580, %v579
        %597 = vmatpush.bf16.msra.mxu0 %v588
        %598 = vmatpush.bf16.msra.mxu0 %v587
        %599 = vmatpush.bf16.msra.mxu0 %v586
        %600 = vmatpush.bf16.msra.mxu0 %v585
        %601 = vmatpush.bf16.msra.mxu0 %v584
        %602 = vmatpush.bf16.msra.mxu0 %v583
        %603 = vmatpush.bf16.msra.mxu0 %v582
        %604 = vmatpush.bf16.msra.mxu0 %v581
        %605 = vmatmul.bf16.gmra.mxu0 %v528
        %v606 = vpop.f32.mrf.mxu0
        %v607 = vadd.f32 %v547, %v606
        %v608 = vpop.f32.mrf.mxu0
        %v609 = vadd.f32 %v547, %v608
        %610 = vdwg.mxu0
        %v611 = vtanh.pop %v607
        %v612 = vtanh.pop %v609
        %613 = vst [vmem:[%s348] sm:$0xff] %v611
        %614 = vst [vmem:[%s348 + $0x8] sm:$0xff] %v612
        %s615 = sand.u32 %s186, 1
        %s616 = scalar_lea.sflag [#allocation4], %s615
        %s617 = sand.u32 %s186, 1
        %s618 = smul.addr %s617, 16
        %s619 = scalar_lea.vmem [#allocation10], %s618
        // Predicated region
        $region65: #{tpu_custom_call.1} parent=47 // pred_check
          %p620 = pneg %p196
        $region66: #{tpu_custom_call.1} parent=47 // pred_check_branch
          %622 = sbr.rel (%p620) target = $region68
        $region67: #{tpu_custom_call.1} parent=47 // pred_region
          %s623 = smul.u32 2, %s26
          %625 = vsyncadd %s616, 0
          %s626 = smul.addr %s623, 8
          %s627 = scalar_lea.hbm %s7, %s626
          %s628 = sshll.u32 %s619, 4
          %s629 = int_to_ptr.vmem [resolvable:$true] %s628
          %s630 = sshll.u32 %s627, 4
          %s631 = int_to_ptr.hbm [resolvable:$true] %s630
          %636 = dma.vmem_to_hbm [thread:$0]  %s629, 256, %s631, %s616, 128, 128, 8
        $region68: #{tpu_custom_call.1} parent=47 // pred_fallthru
          _
      $region48: #{tpu_custom_call.1} parent=5 // pred_fallthru
        _
      %p637 = scmp.le.s32.totalorder 2, %s21
      // Predicated region
      $region69: #{tpu_custom_call.1} parent=5 // pred_check
        %p638 = pneg %p637
      $region70: #{tpu_custom_call.1} parent=5 // pred_check_branch
        %640 = sbr.rel (%p638) target = $region72
      $region71: #{tpu_custom_call.1} parent=5 // pred_region
        %s641 = ssub.s32 %s21, 2
        // Predicated region
        $region73: #{tpu_custom_call.1} parent=71 // pred_check
          %p642 = pneg %p202
        $region74: #{tpu_custom_call.1} parent=71 // pred_check_branch
          %644 = sbr.rel (%p642) target = $region76
        $region75: #{tpu_custom_call.1} parent=71 // pred_region
          %s645 = sand.u32 %s187, 1
          %s646 = scalar_lea.sflag [#allocation4], %s645
          %s647 = sand.u32 %s187, 1
          %s648 = smul.addr %s647, 16
          %s649 = scalar_lea.vmem [#allocation10], %s648
          %651 = dma.done %s646, 256
        $region76: #{tpu_custom_call.1} parent=71 // pred_fallthru
          _
      $region72: #{tpu_custom_call.1} parent=5 // pred_fallthru
        _
    $region6: #{tpu_custom_call.1} parent=1 // loop_footer
      %s25 = sadd.s32 1, %s21
    $region7: #{tpu_custom_call.1} parent=1 // loop_footer_branch
      %20 = sbr.rel target = $region3
    $region8: #{tpu_custom_call.1} parent=1 // loop_exit
      _
    %652 = vsyncpa [#allocation3], 1
    %s653 = scalar_lea.sflag [#allocation3], 1
    %654 = vsyncpa %s653, 1
    %655 = vsyncpa [#allocation6], 1
    %656 = vsyncpa [#allocation9], 1
    %657 = vsyncpa [#allocation4], 1
    %s658 = scalar_lea.sflag [#allocation4], 1
    %659 = vsyncpa %s658, 1

</llo_original>
